<compile_context>
chip_gen: v7x
topology: tpu7x:2x2x1
jax: 0.10.0
libtpu: 0.0.40
codegen_flags: <defaults>
</compile_context>

<pallas_src>
import numpy as np
import jax
import jax.numpy as jnp
from jax.experimental import pallas as pl
from jax.experimental.pallas import tpu as pltpu


def _round_up(n: int, m: int) -> int:
    return -(-n // m) * m


def _make_reflect_kernel(radius: float, half_aperture: float, eps: float = 1e-6):
    R = float(radius)
    inv_R = 1.0 / R
    r2_max = float(half_aperture) ** 2

    def kernel(p_ref, v_ref, pout_ref, vout_ref, valid_ref):
        # Each component is a fully dense (rows_block, lanes) tile.
        px = p_ref[0, :, :]
        py = p_ref[1, :, :]
        pz = p_ref[2, :, :]
        vx = v_ref[0, :, :]
        vy = v_ref[1, :, :]
        vz = v_ref[2, :, :]

        # Sphere of curvature radius R centered at (R, 0, 0) in the surface
        # frame, so the apex passes through the local origin (identity chain).
        ocx = px - R

        # Quadratic |oc + t v|^2 = R^2  (pure VPU math, no cross-lane ops).
        a = vx * vx + vy * vy + vz * vz
        b = 2.0 * (ocx * vx + py * vy + pz * vz)
        c = ocx * ocx + py * py + pz * pz - R * R

        disc = b * b - 4.0 * a * c
        hit = disc >= 0.0
        sqrt_disc = jnp.sqrt(jnp.maximum(disc, 0.0))

        two_a = 2.0 * a
        inv_2a = pl.reciprocal(two_a, approx=True)      # EUP slot (cheap)
        inv_2a = inv_2a * (2.0 - two_a * inv_2a)        # one Newton step
        t0 = (-b - sqrt_disc) * inv_2a
        t1 = (-b + sqrt_disc) * inv_2a
        # nearest root in front of the ray (first intersection = apex side)
        t = jnp.where(t0 > eps, t0, t1)

        # collision point X = P + t V
        xx = px + t * vx
        xy = py + t * vy
        xz = pz + t * vz

        # surface normal at X (sign irrelevant for reflection)
        nx = (xx - R) * inv_R
        ny = xy * inv_R
        nz = xz * inv_R

        # reflected = V - 2 (V.N) N
        vdotn2 = 2.0 * (vx * nx + vy * ny + vz * nz)
        rx = vx - vdotn2 * nx
        ry = vy - vdotn2 * ny
        rz = vz - vdotn2 * nz

        # aperture (diameter) check in the transverse (y, z) plane
        r2 = xy * xy + xz * xz
        valid = hit & (t > eps) & (r2 <= r2_max)

        # miss == 'pass': keep original ray where no valid collision.
        pout_ref[0, :, :] = jnp.where(valid, xx, px)
        pout_ref[1, :, :] = jnp.where(valid, xy, py)
        pout_ref[2, :, :] = jnp.where(valid, xz, pz)
        vout_ref[0, :, :] = jnp.where(valid, rx, vx)
        vout_ref[1, :, :] = jnp.where(valid, ry, vy)
        vout_ref[2, :, :] = jnp.where(valid, rz, vz)
        valid_ref[...] = valid.astype(jnp.float32)

    return kernel


def reflective_surface_forward(P, V, *, radius=2.0, diameter=1.0,
                               lanes=512, max_rows_per_block=128):
    """P, V: (3, N) float32 rays. Returns (P_out (3,N), V_out (3,N), valid bool (N,)).

    Rays are laid out as a dense (rows, lanes) grid per component so the kernel
    runs on fully dense vreg tiles; rows_block * lanes rays per grid step
    (default 128 * 512 = 64K).
    """
    D, N = P.shape
    assert D == 3 and V.shape == (3, N)

    rows = max(1, pl.cdiv(N, lanes))
    if rows >= 2 * max_rows_per_block:
        rows_block = max_rows_per_block              # 64K rays / grid step
    elif rows > 8:
        # >= 2 grid steps so ("parallel",) can shard across both v7x TCs.
        rows_block = _round_up(pl.cdiv(rows, 2), 8)
    else:
        rows_block = 8
    rows_pad = _round_up(rows, rows_block)
    n_pad = rows_pad * lanes

    P = P.astype(jnp.float32)
    V = V.astype(jnp.float32)
    if n_pad != N:
        # Remainder-only pad (zero rays are masked out by the kernel);
        # the reshape below is layout-free.
        P = jnp.pad(P, ((0, 0), (0, n_pad - N)))
        V = jnp.pad(V, ((0, 0), (0, n_pad - N)))
    P3 = P.reshape(3, rows_pad, lanes)
    V3 = V.reshape(3, rows_pad, lanes)

    kernel = _make_reflect_kernel(radius, diameter / 2.0)
    pv_spec = pl.BlockSpec((3, rows_block, lanes), lambda i: (0, i, 0))
    m_spec = pl.BlockSpec((rows_block, lanes), lambda i: (i, 0))

    p_out, v_out, valid_f = pl.pallas_call(
        kernel,
        out_shape=(
            jax.ShapeDtypeStruct((3, rows_pad, lanes), jnp.float32),
            jax.ShapeDtypeStruct((3, rows_pad, lanes), jnp.float32),
            jax.ShapeDtypeStruct((rows_pad, lanes), jnp.float32),
        ),
        grid_spec=pltpu.PrefetchScalarGridSpec(
            num_scalar_prefetch=0,
            grid=(rows_pad // rows_block,),
            in_specs=[pv_spec, pv_spec],
            out_specs=(pv_spec, pv_spec, m_spec),
        ),
        compiler_params=pltpu.CompilerParams(
            dimension_semantics=("parallel",),   # v7x: shards grid across 2 TCs
        ),
    )(P3, V3)

    p_out = p_out.reshape(3, n_pad)[:, :N]
    v_out = v_out.reshape(3, n_pad)[:, :N]
    valid = valid_f.reshape(n_pad)[:N] > 0.5
    return p_out, v_out, valid


def _reference(P, V, radius=2.0, diameter=1.0, eps=1e-6):
    """Plain-JAX reference of the same math, for a correctness check."""
    R = radius
    center = jnp.array([[R], [0.0], [0.0]], dtype=P.dtype)
    oc = P - center
    a = jnp.sum(V * V, axis=0, keepdims=True)
    b = 2.0 * jnp.sum(oc * V, axis=0, keepdims=True)
    c = jnp.sum(oc * oc, axis=0, keepdims=True) - R * R
    disc = b * b - 4.0 * a * c
    sqrt_disc = jnp.sqrt(jnp.maximum(disc, 0.0))
    t0 = (-b - sqrt_disc) / (2.0 * a)
    t1 = (-b + sqrt_disc) / (2.0 * a)
    t = jnp.where(t0 > eps, t0, t1)
    X = P + t * V
    Nrm = (X - center) / R
    refl = V - 2.0 * jnp.sum(V * Nrm, axis=0, keepdims=True) * Nrm
    r2 = X[1:2] ** 2 + X[2:3] ** 2
    valid = (disc >= 0.0) & (t > eps) & (r2 <= (diameter / 2.0) ** 2)
    return jnp.where(valid, X, P), jnp.where(valid, refl, V), valid[0]


if __name__ == "__main__":
    key = jax.random.PRNGKey(0)
    k1, k2, k3 = jax.random.split(key, 3)

    N = 1000  # number of rays (non-multiple of lanes to exercise the pad path)
    # Ray origins: in front of the surface (x < 0), small transverse spread.
    px = jax.random.uniform(k1, (1, N), jnp.float32, minval=-3.0, maxval=-1.0)
    pyz = jax.random.uniform(k2, (2, N), jnp.float32, minval=-0.4, maxval=0.4)
    P = jnp.concatenate([px, pyz], axis=0)

    # Ray directions: mostly along +x, slightly tilted, normalized.
    dyz = jax.random.uniform(k3, (2, N), jnp.float32, minval=-0.1, maxval=0.1)
    V = jnp.concatenate([jnp.ones((1, N), jnp.float32), dyz], axis=0)
    V = V / jnp.linalg.norm(V, axis=0, keepdims=True)

    p_out, v_out, valid = reflective_surface_forward(P, V)
    jax.block_until_ready((p_out, v_out, valid))

    p_ref, v_ref, valid_ref = _reference(P, V)
    np.testing.assert_allclose(np.asarray(p_out), np.asarray(p_ref), rtol=1e-5, atol=1e-5)
    np.testing.assert_allclose(np.asarray(v_out), np.asarray(v_ref), rtol=1e-5, atol=1e-5)
    np.testing.assert_array_equal(np.asarray(valid), np.asarray(valid_ref))

    print("KERNEL_OK")
</pallas_src>

<mosaic_0001>
module attributes {stable_mosaic.version = 11 : i64} {
  func.func @kernel(%arg0: i32, %arg1: memref<3x8x512xf32, #tpu.memory_space<vmem>>, %arg2: memref<3x8x512xf32, #tpu.memory_space<vmem>>, %arg3: memref<3x8x512xf32, #tpu.memory_space<vmem>>, %arg4: memref<3x8x512xf32, #tpu.memory_space<vmem>>, %arg5: memref<8x512xf32, #tpu.memory_space<vmem>>) attributes {dimension_semantics = [#tpu.dimension_semantics<parallel>], iteration_bounds = array<i64: 1>, scalar_prefetch = 0 : i64, scratch_operands = 0 : i64, tpu.core_type = #tpu.core_type<tc>, window_params = [{transform_indices = @transform_0, window_bounds = array<i64: 3, 8, 512>}, {transform_indices = @transform_1, window_bounds = array<i64: 3, 8, 512>}, {transform_indices = @transform_2, window_bounds = array<i64: 3, 8, 512>}, {transform_indices = @transform_3, window_bounds = array<i64: 3, 8, 512>}, {transform_indices = @transform_4, window_bounds = array<i64: 8, 512>}]} {
    %c0 = arith.constant 0 : index
    %c0_0 = arith.constant 0 : index
    %c0_1 = arith.constant 0 : index
    %0 = vector.load %arg1[%c0, %c0_0, %c0_1] : memref<3x8x512xf32, #tpu.memory_space<vmem>>, vector<1x8x512xf32>
    %1 = vector.shape_cast %0 : vector<1x8x512xf32> to vector<8x512xf32>
    %c1 = arith.constant 1 : index
    %c0_2 = arith.constant 0 : index
    %c0_3 = arith.constant 0 : index
    %2 = vector.load %arg1[%c1, %c0_2, %c0_3] : memref<3x8x512xf32, #tpu.memory_space<vmem>>, vector<1x8x512xf32>
    %3 = vector.shape_cast %2 : vector<1x8x512xf32> to vector<8x512xf32>
    %c2 = arith.constant 2 : index
    %c0_4 = arith.constant 0 : index
    %c0_5 = arith.constant 0 : index
    %4 = vector.load %arg1[%c2, %c0_4, %c0_5] : memref<3x8x512xf32, #tpu.memory_space<vmem>>, vector<1x8x512xf32>
    %5 = vector.shape_cast %4 : vector<1x8x512xf32> to vector<8x512xf32>
    %c0_6 = arith.constant 0 : index
    %c0_7 = arith.constant 0 : index
    %c0_8 = arith.constant 0 : index
    %6 = vector.load %arg2[%c0_6, %c0_7, %c0_8] : memref<3x8x512xf32, #tpu.memory_space<vmem>>, vector<1x8x512xf32>
    %7 = vector.shape_cast %6 : vector<1x8x512xf32> to vector<8x512xf32>
    %c1_9 = arith.constant 1 : index
    %c0_10 = arith.constant 0 : index
    %c0_11 = arith.constant 0 : index
    %8 = vector.load %arg2[%c1_9, %c0_10, %c0_11] : memref<3x8x512xf32, #tpu.memory_space<vmem>>, vector<1x8x512xf32>
    %9 = vector.shape_cast %8 : vector<1x8x512xf32> to vector<8x512xf32>
    %c2_12 = arith.constant 2 : index
    %c0_13 = arith.constant 0 : index
    %c0_14 = arith.constant 0 : index
    %10 = vector.load %arg2[%c2_12, %c0_13, %c0_14] : memref<3x8x512xf32, #tpu.memory_space<vmem>>, vector<1x8x512xf32>
    %11 = vector.shape_cast %10 : vector<1x8x512xf32> to vector<8x512xf32>
    %cst = arith.constant 2.000000e+00 : f32
    %12 = vector.broadcast %cst : f32 to vector<8x512xf32>
    %13 = arith.subf %1, %12 : vector<8x512xf32>
    %14 = arith.mulf %7, %7 : vector<8x512xf32>
    %15 = arith.mulf %9, %9 : vector<8x512xf32>
    %16 = arith.addf %14, %15 : vector<8x512xf32>
    %17 = arith.mulf %11, %11 : vector<8x512xf32>
    %18 = arith.addf %16, %17 : vector<8x512xf32>
    %19 = arith.mulf %13, %7 : vector<8x512xf32>
    %20 = arith.mulf %3, %9 : vector<8x512xf32>
    %21 = arith.addf %19, %20 : vector<8x512xf32>
    %22 = arith.mulf %5, %11 : vector<8x512xf32>
    %23 = arith.addf %21, %22 : vector<8x512xf32>
    %cst_15 = arith.constant 2.000000e+00 : f32
    %24 = vector.broadcast %cst_15 : f32 to vector<8x512xf32>
    %25 = arith.mulf %24, %23 : vector<8x512xf32>
    %26 = arith.mulf %13, %13 : vector<8x512xf32>
    %27 = arith.mulf %3, %3 : vector<8x512xf32>
    %28 = arith.addf %26, %27 : vector<8x512xf32>
    %29 = arith.mulf %5, %5 : vector<8x512xf32>
    %30 = arith.addf %28, %29 : vector<8x512xf32>
    %cst_16 = arith.constant 4.000000e+00 : f32
    %31 = vector.broadcast %cst_16 : f32 to vector<8x512xf32>
    %32 = arith.subf %30, %31 : vector<8x512xf32>
    %33 = arith.mulf %25, %25 : vector<8x512xf32>
    %cst_17 = arith.constant 4.000000e+00 : f32
    %34 = vector.broadcast %cst_17 : f32 to vector<8x512xf32>
    %35 = arith.mulf %34, %18 : vector<8x512xf32>
    %36 = arith.mulf %35, %32 : vector<8x512xf32>
    %37 = arith.subf %33, %36 : vector<8x512xf32>
    %cst_18 = arith.constant 0.000000e+00 : f32
    %38 = vector.broadcast %cst_18 : f32 to vector<8x512xf32>
    %39 = arith.cmpf oge, %37, %38 : vector<8x512xf32>
    %cst_19 = arith.constant 0.000000e+00 : f32
    %40 = vector.broadcast %cst_19 : f32 to vector<8x512xf32>
    %41 = arith.maximumf %37, %40 : vector<8x512xf32>
    %42 = math.sqrt %41 : vector<8x512xf32>
    %cst_20 = arith.constant 2.000000e+00 : f32
    %43 = vector.broadcast %cst_20 : f32 to vector<8x512xf32>
    %44 = arith.mulf %43, %18 : vector<8x512xf32>
    %45 = tpu.reciprocal %44 {approx = true} : vector<8x512xf32> -> vector<8x512xf32>
    %46 = arith.mulf %44, %45 : vector<8x512xf32>
    %cst_21 = arith.constant 2.000000e+00 : f32
    %47 = vector.broadcast %cst_21 : f32 to vector<8x512xf32>
    %48 = arith.subf %47, %46 : vector<8x512xf32>
    %49 = arith.mulf %45, %48 : vector<8x512xf32>
    %cst_22 = arith.constant 0.000000e+00 : f32
    %50 = vector.broadcast %cst_22 : f32 to vector<8x512xf32>
    %51 = arith.subf %50, %25 : vector<8x512xf32>
    %52 = arith.subf %51, %42 : vector<8x512xf32>
    %53 = arith.mulf %52, %49 : vector<8x512xf32>
    %cst_23 = arith.constant 0.000000e+00 : f32
    %54 = vector.broadcast %cst_23 : f32 to vector<8x512xf32>
    %55 = arith.subf %54, %25 : vector<8x512xf32>
    %56 = arith.addf %55, %42 : vector<8x512xf32>
    %57 = arith.mulf %56, %49 : vector<8x512xf32>
    %cst_24 = arith.constant 9.99999997E-7 : f32
    %58 = vector.broadcast %cst_24 : f32 to vector<8x512xf32>
    %59 = arith.cmpf ogt, %53, %58 : vector<8x512xf32>
    %60 = arith.select %59, %53, %57 : vector<8x512xi1>, vector<8x512xf32>
    %61 = arith.mulf %60, %7 : vector<8x512xf32>
    %62 = arith.addf %1, %61 : vector<8x512xf32>
    %63 = arith.mulf %60, %9 : vector<8x512xf32>
    %64 = arith.addf %3, %63 : vector<8x512xf32>
    %65 = arith.mulf %60, %11 : vector<8x512xf32>
    %66 = arith.addf %5, %65 : vector<8x512xf32>
    %cst_25 = arith.constant 2.000000e+00 : f32
    %67 = vector.broadcast %cst_25 : f32 to vector<8x512xf32>
    %68 = arith.subf %62, %67 : vector<8x512xf32>
    %cst_26 = arith.constant 5.000000e-01 : f32
    %69 = vector.broadcast %cst_26 : f32 to vector<8x512xf32>
    %70 = arith.mulf %68, %69 : vector<8x512xf32>
    %cst_27 = arith.constant 5.000000e-01 : f32
    %71 = vector.broadcast %cst_27 : f32 to vector<8x512xf32>
    %72 = arith.mulf %64, %71 : vector<8x512xf32>
    %cst_28 = arith.constant 5.000000e-01 : f32
    %73 = vector.broadcast %cst_28 : f32 to vector<8x512xf32>
    %74 = arith.mulf %66, %73 : vector<8x512xf32>
    %75 = arith.mulf %7, %70 : vector<8x512xf32>
    %76 = arith.mulf %9, %72 : vector<8x512xf32>
    %77 = arith.addf %75, %76 : vector<8x512xf32>
    %78 = arith.mulf %11, %74 : vector<8x512xf32>
    %79 = arith.addf %77, %78 : vector<8x512xf32>
    %cst_29 = arith.constant 2.000000e+00 : f32
    %80 = vector.broadcast %cst_29 : f32 to vector<8x512xf32>
    %81 = arith.mulf %80, %79 : vector<8x512xf32>
    %82 = arith.mulf %81, %70 : vector<8x512xf32>
    %83 = arith.subf %7, %82 : vector<8x512xf32>
    %84 = arith.mulf %81, %72 : vector<8x512xf32>
    %85 = arith.subf %9, %84 : vector<8x512xf32>
    %86 = arith.mulf %81, %74 : vector<8x512xf32>
    %87 = arith.subf %11, %86 : vector<8x512xf32>
    %88 = arith.mulf %64, %64 : vector<8x512xf32>
    %89 = arith.mulf %66, %66 : vector<8x512xf32>
    %90 = arith.addf %88, %89 : vector<8x512xf32>
    %cst_30 = arith.constant 9.99999997E-7 : f32
    %91 = vector.broadcast %cst_30 : f32 to vector<8x512xf32>
    %92 = arith.cmpf ogt, %60, %91 : vector<8x512xf32>
    %93 = arith.andi %39, %92 : vector<8x512xi1>
    %cst_31 = arith.constant 2.500000e-01 : f32
    %94 = vector.broadcast %cst_31 : f32 to vector<8x512xf32>
    %95 = arith.cmpf ole, %90, %94 : vector<8x512xf32>
    %96 = arith.andi %93, %95 : vector<8x512xi1>
    %97 = arith.select %96, %62, %1 : vector<8x512xi1>, vector<8x512xf32>
    %c0_32 = arith.constant 0 : index
    %c0_33 = arith.constant 0 : index
    %c0_34 = arith.constant 0 : index
    %98 = vector.load %arg3[%c0_32, %c0_33, %c0_34] : memref<3x8x512xf32, #tpu.memory_space<vmem>>, vector<1x8x512xf32>
    %99 = vector.shape_cast %98 : vector<1x8x512xf32> to vector<8x512xf32>
    %100 = vector.shape_cast %97 : vector<8x512xf32> to vector<1x8x512xf32>
    tpu.vector_store %arg3[%c0_32, %c0_33, %c0_34], %100 {strides = array<i32>} : memref<3x8x512xf32, #tpu.memory_space<vmem>>, vector<1x8x512xf32>,
    %101 = arith.select %96, %64, %3 : vector<8x512xi1>, vector<8x512xf32>
    %c1_35 = arith.constant 1 : index
    %c0_36 = arith.constant 0 : index
    %c0_37 = arith.constant 0 : index
    %102 = vector.load %arg3[%c1_35, %c0_36, %c0_37] : memref<3x8x512xf32, #tpu.memory_space<vmem>>, vector<1x8x512xf32>
    %103 = vector.shape_cast %102 : vector<1x8x512xf32> to vector<8x512xf32>
    %104 = vector.shape_cast %101 : vector<8x512xf32> to vector<1x8x512xf32>
    tpu.vector_store %arg3[%c1_35, %c0_36, %c0_37], %104 {strides = array<i32>} : memref<3x8x512xf32, #tpu.memory_space<vmem>>, vector<1x8x512xf32>,
    %105 = arith.select %96, %66, %5 : vector<8x512xi1>, vector<8x512xf32>
    %c2_38 = arith.constant 2 : index
    %c0_39 = arith.constant 0 : index
    %c0_40 = arith.constant 0 : index
    %106 = vector.load %arg3[%c2_38, %c0_39, %c0_40] : memref<3x8x512xf32, #tpu.memory_space<vmem>>, vector<1x8x512xf32>
    %107 = vector.shape_cast %106 : vector<1x8x512xf32> to vector<8x512xf32>
    %108 = vector.shape_cast %105 : vector<8x512xf32> to vector<1x8x512xf32>
    tpu.vector_store %arg3[%c2_38, %c0_39, %c0_40], %108 {strides = array<i32>} : memref<3x8x512xf32, #tpu.memory_space<vmem>>, vector<1x8x512xf32>,
    %109 = arith.select %96, %83, %7 : vector<8x512xi1>, vector<8x512xf32>
    %c0_41 = arith.constant 0 : index
    %c0_42 = arith.constant 0 : index
    %c0_43 = arith.constant 0 : index
    %110 = vector.load %arg4[%c0_41, %c0_42, %c0_43] : memref<3x8x512xf32, #tpu.memory_space<vmem>>, vector<1x8x512xf32>
    %111 = vector.shape_cast %110 : vector<1x8x512xf32> to vector<8x512xf32>
    %112 = vector.shape_cast %109 : vector<8x512xf32> to vector<1x8x512xf32>
    tpu.vector_store %arg4[%c0_41, %c0_42, %c0_43], %112 {strides = array<i32>} : memref<3x8x512xf32, #tpu.memory_space<vmem>>, vector<1x8x512xf32>,
    %113 = arith.select %96, %85, %9 : vector<8x512xi1>, vector<8x512xf32>
    %c1_44 = arith.constant 1 : index
    %c0_45 = arith.constant 0 : index
    %c0_46 = arith.constant 0 : index
    %114 = vector.load %arg4[%c1_44, %c0_45, %c0_46] : memref<3x8x512xf32, #tpu.memory_space<vmem>>, vector<1x8x512xf32>
    %115 = vector.shape_cast %114 : vector<1x8x512xf32> to vector<8x512xf32>
    %116 = vector.shape_cast %113 : vector<8x512xf32> to vector<1x8x512xf32>
    tpu.vector_store %arg4[%c1_44, %c0_45, %c0_46], %116 {strides = array<i32>} : memref<3x8x512xf32, #tpu.memory_space<vmem>>, vector<1x8x512xf32>,
    %117 = arith.select %96, %87, %11 : vector<8x512xi1>, vector<8x512xf32>
    %c2_47 = arith.constant 2 : index
    %c0_48 = arith.constant 0 : index
    %c0_49 = arith.constant 0 : index
    %118 = vector.load %arg4[%c2_47, %c0_48, %c0_49] : memref<3x8x512xf32, #tpu.memory_space<vmem>>, vector<1x8x512xf32>
    %119 = vector.shape_cast %118 : vector<1x8x512xf32> to vector<8x512xf32>
    %120 = vector.shape_cast %117 : vector<8x512xf32> to vector<1x8x512xf32>
    tpu.vector_store %arg4[%c2_47, %c0_48, %c0_49], %120 {strides = array<i32>} : memref<3x8x512xf32, #tpu.memory_space<vmem>>, vector<1x8x512xf32>,
    %121 = arith.extui %96 : vector<8x512xi1> to vector<8x512xi32>
    %122 = arith.sitofp %121 : vector<8x512xi32> to vector<8x512xf32>
    %c0_50 = arith.constant 0 : index
    %c0_51 = arith.constant 0 : index
    %123 = vector.load %arg5[%c0_50, %c0_51] : memref<8x512xf32, #tpu.memory_space<vmem>>, vector<8x512xf32>
    tpu.vector_store %arg5[%c0_50, %c0_51], %122 {strides = array<i32>} : memref<8x512xf32, #tpu.memory_space<vmem>>, vector<8x512xf32>,
    return
  }
  func.func @transform_0(%arg0: i32) -> (i32, i32, i32) {
    %c0_i32 = arith.constant 0 : i32
    %c0_i32_0 = arith.constant 0 : i32
    %c0_i32_1 = arith.constant 0 : i32
    return %c0_i32, %arg0, %c0_i32_0 : i32, i32, i32
  }
  func.func @transform_1(%arg0: i32) -> (i32, i32, i32) {
    %c0_i32 = arith.constant 0 : i32
    %c0_i32_0 = arith.constant 0 : i32
    %c0_i32_1 = arith.constant 0 : i32
    return %c0_i32, %arg0, %c0_i32_0 : i32, i32, i32
  }
  func.func @transform_2(%arg0: i32) -> (i32, i32, i32) {
    %c0_i32 = arith.constant 0 : i32
    %c0_i32_0 = arith.constant 0 : i32
    %c0_i32_1 = arith.constant 0 : i32
    return %c0_i32, %arg0, %c0_i32_0 : i32, i32, i32
  }
  func.func @transform_3(%arg0: i32) -> (i32, i32, i32) {
    %c0_i32 = arith.constant 0 : i32
    %c0_i32_0 = arith.constant 0 : i32
    %c0_i32_1 = arith.constant 0 : i32
    return %c0_i32, %arg0, %c0_i32_0 : i32, i32, i32
  }
  func.func @transform_4(%arg0: i32) -> (i32, i32) {
    %c0_i32 = arith.constant 0 : i32
    %c0_i32_0 = arith.constant 0 : i32
    return %arg0, %c0_i32 : i32, i32
  }
}

</mosaic_0001>

<llo_original>
// kernel: tpu_custom_call.1
$region0: #{tpu_custom_call.1}
  #allocation0 [shape = 'u32[]', space=smem, size = 0x4, offset = 0x4, fixed_abs, tag = 'smem constant byte address 0x4 - core index']
  #allocation1 [shape = 'u32[144,128]{1,0:T(1,128)}', space=vmem, size = 0x12000, scoped, tag = 'internal scratch']
  %s0 = inlined_call_operand.hbm [shape: f32[3,8,512], index: 0, kind: input, shape index: {}]
  %s1 = inlined_call_operand.hbm [shape: f32[3,8,512], index: 1, kind: input, shape index: {}]
  %s2 = inlined_call_operand.hbm [shape: f32[3,8,512], index: 2, kind: output, shape index: {0}]
  %s3 = inlined_call_operand.hbm [shape: f32[3,8,512], index: 3, kind: output, shape index: {1}]
  %s4 = inlined_call_operand.hbm [shape: f32[8,512], index: 4, kind: output, shape index: {2}]
  %5 = xla_tuple %s2, %s3, %s4
  %s6 = sld [smem:[#allocation0]]
  $region42: #{tpu_custom_call.1} parent=0
    _
  %s8 = ssub.s32 1, %s6
  %s9 = scalar_select 0, %s8, %s6
  $region1: #{tpu_custom_call.1} parent=0
    #allocation2 [shape = 'u8[49152]{0}', space=vmem, size = 0xc000, scoped, tag = 'input window, operand 0, single buffered']
    #allocation3 [shape = 's32[1]{0}', space=sflag, size = 0x4, scoped, tag = 'scoped memory for tpu_custom_call.1']
    #allocation4 [shape = 's32[1]{0}', space=sflag, size = 0x4, scoped, tag = 'scoped memory for tpu_custom_call.1']
    #allocation5 [shape = 'u8[49152]{0}', space=vmem, size = 0xc000, scoped, tag = 'input window, operand 1, single buffered']
    #allocation6 [shape = 's32[1]{0}', space=sflag, size = 0x4, scoped, tag = 'scoped memory for tpu_custom_call.1']
    #allocation7 [shape = 'u8[49152]{0}', space=vmem, size = 0xc000, scoped, tag = 'output window, operand 0, single buffered']
    #allocation8 [shape = 'u8[49152]{0}', space=vmem, size = 0xc000, scoped, tag = 'output window, operand 1, single buffered']
    #allocation9 [shape = 's32[1]{0}', space=sflag, size = 0x4, scoped, tag = 'scoped memory for tpu_custom_call.1']
    #allocation10 [shape = 'u8[16384]{0}', space=vmem, size = 0x4000, scoped, tag = 'output window, operand 2, single buffered']
    %10 = vsyncpa [#allocation3], 0
    %11 = vsyncpa [#allocation6], 0
    %12 = vsyncpa [#allocation4], 0
    %13 = vsyncpa [#allocation9], 0
    // Predicated region
    $region2: #{tpu_custom_call.1} parent=1 // pred_check
      _
    $region3: #{tpu_custom_call.1} parent=1 // pred_check_branch
      %15 = sbr.rel (0) target = $region5
    $region4: #{tpu_custom_call.1} parent=1 // pred_region
      %s17 = ssub.s32 1536, 1536
      %18 = vsyncadd [#allocation3], %s17
      %s19 = sshll.u32 [#allocation2], 4
      %s20 = int_to_ptr.vmem [resolvable:$true] %s19
      %25 = dma.hbm_to_vmem [thread:$0]  %s0, 1536, %s20, [#allocation3], 512, 512, 32
    $region5: #{tpu_custom_call.1} parent=1 // pred_fallthru
      _
    // Predicated region
    $region6: #{tpu_custom_call.1} parent=1 // pred_check
      _
    $region7: #{tpu_custom_call.1} parent=1 // pred_check_branch
      %27 = sbr.rel (0) target = $region9
    $region8: #{tpu_custom_call.1} parent=1 // pred_region
      %s29 = ssub.s32 1536, 1536
      %30 = vsyncadd [#allocation6], %s29
      %s31 = sshll.u32 [#allocation5], 4
      %s32 = int_to_ptr.vmem [resolvable:$true] %s31
      %37 = dma.hbm_to_vmem [thread:$0]  %s1, 1536, %s32, [#allocation6], 512, 512, 32
    $region9: #{tpu_custom_call.1} parent=1 // pred_fallthru
      _
    // Predicated region
    $region10: #{tpu_custom_call.1} parent=1 // pred_check
      _
    $region11: #{tpu_custom_call.1} parent=1 // pred_check_branch
      %39 = sbr.rel (0) target = $region13
    $region12: #{tpu_custom_call.1} parent=1 // pred_region
      %40 = dma.done [#allocation3], 1536
    $region13: #{tpu_custom_call.1} parent=1 // pred_fallthru
      _
    // Predicated region
    $region14: #{tpu_custom_call.1} parent=1 // pred_check
      _
    $region15: #{tpu_custom_call.1} parent=1 // pred_check_branch
      %42 = sbr.rel (0) target = $region17
    $region16: #{tpu_custom_call.1} parent=1 // pred_region
      %43 = dma.done [#allocation6], 1536
    $region17: #{tpu_custom_call.1} parent=1 // pred_fallthru
      _
    %v44 = vld [vmem:[#allocation2] sm:$0xff]
    %v45 = vld [vmem:[#allocation2 + $0x8] sm:$0xff]
    %v46 = vld [vmem:[#allocation2 + $0x10] sm:$0xff]
    %v47 = vld [vmem:[#allocation2 + $0x18] sm:$0xff]
    %s48 = scalar_lea.vmem [#allocation2], 32
    %v49 = vld [vmem:[%s48] sm:$0xff]
    %v50 = vld [vmem:[%s48 + $0x8] sm:$0xff]
    %v51 = vld [vmem:[%s48 + $0x10] sm:$0xff]
    %v52 = vld [vmem:[%s48 + $0x18] sm:$0xff]
    %s53 = scalar_lea.vmem [#allocation2], 64
    %v54 = vld [vmem:[%s53] sm:$0xff]
    %v55 = vld [vmem:[%s53 + $0x8] sm:$0xff]
    %v56 = vld [vmem:[%s53 + $0x10] sm:$0xff]
    %v57 = vld [vmem:[%s53 + $0x18] sm:$0xff]
    %v58 = vld [vmem:[#allocation5] sm:$0xff]
    %v59 = vld [vmem:[#allocation5 + $0x8] sm:$0xff]
    %v60 = vld [vmem:[#allocation5 + $0x10] sm:$0xff]
    %v61 = vld [vmem:[#allocation5 + $0x18] sm:$0xff]
    %s62 = scalar_lea.vmem [#allocation5], 32
    %v63 = vld [vmem:[%s62] sm:$0xff]
    %v64 = vld [vmem:[%s62 + $0x8] sm:$0xff]
    %v65 = vld [vmem:[%s62 + $0x10] sm:$0xff]
    %v66 = vld [vmem:[%s62 + $0x18] sm:$0xff]
    %s67 = scalar_lea.vmem [#allocation5], 64
    %v68 = vld [vmem:[%s67] sm:$0xff]
    %v69 = vld [vmem:[%s67 + $0x8] sm:$0xff]
    %v70 = vld [vmem:[%s67 + $0x10] sm:$0xff]
    %v71 = vld [vmem:[%s67 + $0x18] sm:$0xff]
    %v72 = vsub.f32 %v44, 2.0
    %v73 = vsub.f32 %v45, 2.0
    %v74 = vsub.f32 %v46, 2.0
    %v75 = vsub.f32 %v47, 2.0
    %v76 = vmul.f32 %v58, %v58
    %v77 = vmul.f32 %v59, %v59
    %v78 = vmul.f32 %v60, %v60
    %v79 = vmul.f32 %v61, %v61
    %v80 = vmul.f32 %v63, %v63
    %v81 = vmul.f32 %v64, %v64
    %v82 = vmul.f32 %v65, %v65
    %v83 = vmul.f32 %v66, %v66
    %v84 = vadd.f32 %v76, %v80
    %v85 = vadd.f32 %v77, %v81
    %v86 = vadd.f32 %v78, %v82
    %v87 = vadd.f32 %v79, %v83
    %v88 = vmul.f32 %v68, %v68
    %v89 = vmul.f32 %v69, %v69
    %v90 = vmul.f32 %v70, %v70
    %v91 = vmul.f32 %v71, %v71
    %v92 = vadd.f32 %v84, %v88
    %v93 = vadd.f32 %v85, %v89
    %v94 = vadd.f32 %v86, %v90
    %v95 = vadd.f32 %v87, %v91
    %v96 = vmul.f32 %v72, %v58
    %v97 = vmul.f32 %v73, %v59
    %v98 = vmul.f32 %v74, %v60
    %v99 = vmul.f32 %v75, %v61
    %v100 = vmul.f32 %v49, %v63
    %v101 = vmul.f32 %v50, %v64
    %v102 = vmul.f32 %v51, %v65
    %v103 = vmul.f32 %v52, %v66
    %v104 = vadd.f32 %v96, %v100
    %v105 = vadd.f32 %v97, %v101
    %v106 = vadd.f32 %v98, %v102
    %v107 = vadd.f32 %v99, %v103
    %v108 = vmul.f32 %v54, %v68
    %v109 = vmul.f32 %v55, %v69
    %v110 = vmul.f32 %v56, %v70
    %v111 = vmul.f32 %v57, %v71
    %v112 = vadd.f32 %v104, %v108
    %v113 = vadd.f32 %v105, %v109
    %v114 = vadd.f32 %v106, %v110
    %v115 = vadd.f32 %v107, %v111
    %v116 = vmul.f32 %v112, 2.0
    %v117 = vmul.f32 %v113, 2.0
    %v118 = vmul.f32 %v114, 2.0
    %v119 = vmul.f32 %v115, 2.0
    %v120 = vmul.f32 %v72, %v72
    %v121 = vmul.f32 %v73, %v73
    %v122 = vmul.f32 %v74, %v74
    %v123 = vmul.f32 %v75, %v75
    %v124 = vmul.f32 %v49, %v49
    %v125 = vmul.f32 %v50, %v50
    %v126 = vmul.f32 %v51, %v51
    %v127 = vmul.f32 %v52, %v52
    %v128 = vadd.f32 %v120, %v124
    %v129 = vadd.f32 %v121, %v125
    %v130 = vadd.f32 %v122, %v126
    %v131 = vadd.f32 %v123, %v127
    %v132 = vmul.f32 %v54, %v54
    %v133 = vmul.f32 %v55, %v55
    %v134 = vmul.f32 %v56, %v56
    %v135 = vmul.f32 %v57, %v57
    %v136 = vadd.f32 %v128, %v132
    %v137 = vadd.f32 %v129, %v133
    %v138 = vadd.f32 %v130, %v134
    %v139 = vadd.f32 %v131, %v135
    %v140 = vsub.f32 %v136, 4.0
    %v141 = vsub.f32 %v137, 4.0
    %v142 = vsub.f32 %v138, 4.0
    %v143 = vsub.f32 %v139, 4.0
    %v144 = vmul.f32 %v116, %v116
    %v145 = vmul.f32 %v117, %v117
    %v146 = vmul.f32 %v118, %v118
    %v147 = vmul.f32 %v119, %v119
    %v148 = vmul.f32 %v92, 4.0
    %v149 = vmul.f32 %v93, 4.0
    %v150 = vmul.f32 %v94, 4.0
    %v151 = vmul.f32 %v95, 4.0
    %v152 = vmul.f32 %v148, %v140
    %v153 = vmul.f32 %v149, %v141
    %v154 = vmul.f32 %v150, %v142
    %v155 = vmul.f32 %v151, %v143
    %v156 = vsub.f32 %v144, %v152
    %v157 = vsub.f32 %v145, %v153
    %v158 = vsub.f32 %v146, %v154
    %v159 = vsub.f32 %v147, %v155
    %vm160 = vcmp.ge.f32.partialorder %v156, 0.0
    %vm161 = vcmp.ge.f32.partialorder %v157, 0.0
    %vm162 = vcmp.ge.f32.partialorder %v158, 0.0
    %vm163 = vcmp.ge.f32.partialorder %v159, 0.0
    %v164 = vmax.f32 %v156, 0.0
    %v165 = vmax.f32 %v157, 0.0
    %v166 = vmax.f32 %v158, 0.0
    %v167 = vmax.f32 %v159, 0.0
    %v168 = vrsqrt.pop %v164
    %v169 = vmul.f32 %v164, %v168
    %vm170 = vcmp.eq.f32.partialorder %v164, inf
    %v171 = vsel %vm170, %v164, %v169
    %vm172 = vcmp.eq.f32.partialorder %v164, 0.0
    %v173 = vand.u32 %v164, 2147483648
    %v174 = vsel %vm172, %v173, %v171
    %v175 = vrsqrt.pop %v165
    %v176 = vmul.f32 %v165, %v175
    %vm177 = vcmp.eq.f32.partialorder %v165, inf
    %v178 = vsel %vm177, %v165, %v176
    %vm179 = vcmp.eq.f32.partialorder %v165, 0.0
    %v180 = vand.u32 %v165, 2147483648
    %v181 = vsel %vm179, %v180, %v178
    %v182 = vrsqrt.pop %v166
    %v183 = vmul.f32 %v166, %v182
    %vm184 = vcmp.eq.f32.partialorder %v166, inf
    %v185 = vsel %vm184, %v166, %v183
    %vm186 = vcmp.eq.f32.partialorder %v166, 0.0
    %v187 = vand.u32 %v166, 2147483648
    %v188 = vsel %vm186, %v187, %v185
    %v189 = vrsqrt.pop %v167
    %v190 = vmul.f32 %v167, %v189
    %vm191 = vcmp.eq.f32.partialorder %v167, inf
    %v192 = vsel %vm191, %v167, %v190
    %vm193 = vcmp.eq.f32.partialorder %v167, 0.0
    %v194 = vand.u32 %v167, 2147483648
    %v195 = vsel %vm193, %v194, %v192
    %v196 = vmul.f32 %v92, 2.0
    %v197 = vmul.f32 %v93, 2.0
    %v198 = vmul.f32 %v94, 2.0
    %v199 = vmul.f32 %v95, 2.0
    %v200 = vrcp.pop %v196
    %v201 = vrcp.pop %v197
    %v202 = vrcp.pop %v198
    %v203 = vrcp.pop %v199
    %v204 = vmul.f32 %v196, %v200
    %v205 = vmul.f32 %v197, %v201
    %v206 = vmul.f32 %v198, %v202
    %v207 = vmul.f32 %v199, %v203
    %v208 = vsub.f32 2.0, %v204
    %v209 = vsub.f32 2.0, %v205
    %v210 = vsub.f32 2.0, %v206
    %v211 = vsub.f32 2.0, %v207
    %v212 = vmul.f32 %v200, %v208
    %v213 = vmul.f32 %v201, %v209
    %v214 = vmul.f32 %v202, %v210
    %v215 = vmul.f32 %v203, %v211
    %v216 = vsub.f32 0.0, %v116
    %v217 = vsub.f32 0.0, %v117
    %v218 = vsub.f32 0.0, %v118
    %v219 = vsub.f32 0.0, %v119
    %v220 = vsub.f32 %v216, %v174
    %v221 = vsub.f32 %v217, %v181
    %v222 = vsub.f32 %v218, %v188
    %v223 = vsub.f32 %v219, %v195
    %v224 = vmul.f32 %v220, %v212
    %v225 = vmul.f32 %v221, %v213
    %v226 = vmul.f32 %v222, %v214
    %v227 = vmul.f32 %v223, %v215
    %v228 = vadd.f32 %v216, %v174
    %v229 = vadd.f32 %v217, %v181
    %v230 = vadd.f32 %v218, %v188
    %v231 = vadd.f32 %v219, %v195
    %v232 = vmul.f32 %v228, %v212
    %v233 = vmul.f32 %v229, %v213
    %v234 = vmul.f32 %v230, %v214
    %v235 = vmul.f32 %v231, %v215
    %vm236 = vcmp.gt.f32.partialorder %v224, 1e-06
    %vm237 = vcmp.gt.f32.partialorder %v225, 1e-06
    %vm238 = vcmp.gt.f32.partialorder %v226, 1e-06
    %vm239 = vcmp.gt.f32.partialorder %v227, 1e-06
    %v240 = vsel %vm236, %v224, %v232
    %v241 = vsel %vm237, %v225, %v233
    %v242 = vsel %vm238, %v226, %v234
    %v243 = vsel %vm239, %v227, %v235
    %v244 = vmul.f32 %v240, %v58
    %v245 = vmul.f32 %v241, %v59
    %v246 = vmul.f32 %v242, %v60
    %v247 = vmul.f32 %v243, %v61
    %v248 = vadd.f32 %v44, %v244
    %v249 = vadd.f32 %v45, %v245
    %v250 = vadd.f32 %v46, %v246
    %v251 = vadd.f32 %v47, %v247
    %v252 = vmul.f32 %v240, %v63
    %v253 = vmul.f32 %v241, %v64
    %v254 = vmul.f32 %v242, %v65
    %v255 = vmul.f32 %v243, %v66
    %v256 = vadd.f32 %v49, %v252
    %v257 = vadd.f32 %v50, %v253
    %v258 = vadd.f32 %v51, %v254
    %v259 = vadd.f32 %v52, %v255
    %v260 = vmul.f32 %v240, %v68
    %v261 = vmul.f32 %v241, %v69
    %v262 = vmul.f32 %v242, %v70
    %v263 = vmul.f32 %v243, %v71
    %v264 = vadd.f32 %v54, %v260
    %v265 = vadd.f32 %v55, %v261
    %v266 = vadd.f32 %v56, %v262
    %v267 = vadd.f32 %v57, %v263
    %v268 = vsub.f32 %v248, 2.0
    %v269 = vsub.f32 %v249, 2.0
    %v270 = vsub.f32 %v250, 2.0
    %v271 = vsub.f32 %v251, 2.0
    %v272 = vmul.f32 %v268, 0.5
    %v273 = vmul.f32 %v269, 0.5
    %v274 = vmul.f32 %v270, 0.5
    %v275 = vmul.f32 %v271, 0.5
    %v276 = vmul.f32 %v256, 0.5
    %v277 = vmul.f32 %v257, 0.5
    %v278 = vmul.f32 %v258, 0.5
    %v279 = vmul.f32 %v259, 0.5
    %v280 = vmul.f32 %v264, 0.5
    %v281 = vmul.f32 %v265, 0.5
    %v282 = vmul.f32 %v266, 0.5
    %v283 = vmul.f32 %v267, 0.5
    %v284 = vmul.f32 %v58, %v272
    %v285 = vmul.f32 %v59, %v273
    %v286 = vmul.f32 %v60, %v274
    %v287 = vmul.f32 %v61, %v275
    %v288 = vmul.f32 %v63, %v276
    %v289 = vmul.f32 %v64, %v277
    %v290 = vmul.f32 %v65, %v278
    %v291 = vmul.f32 %v66, %v279
    %v292 = vadd.f32 %v284, %v288
    %v293 = vadd.f32 %v285, %v289
    %v294 = vadd.f32 %v286, %v290
    %v295 = vadd.f32 %v287, %v291
    %v296 = vmul.f32 %v68, %v280
    %v297 = vmul.f32 %v69, %v281
    %v298 = vmul.f32 %v70, %v282
    %v299 = vmul.f32 %v71, %v283
    %v300 = vadd.f32 %v292, %v296
    %v301 = vadd.f32 %v293, %v297
    %v302 = vadd.f32 %v294, %v298
    %v303 = vadd.f32 %v295, %v299
    %v304 = vmul.f32 %v300, 2.0
    %v305 = vmul.f32 %v301, 2.0
    %v306 = vmul.f32 %v302, 2.0
    %v307 = vmul.f32 %v303, 2.0
    %v308 = vmul.f32 %v304, %v272
    %v309 = vmul.f32 %v305, %v273
    %v310 = vmul.f32 %v306, %v274
    %v311 = vmul.f32 %v307, %v275
    %v312 = vsub.f32 %v58, %v308
    %v313 = vsub.f32 %v59, %v309
    %v314 = vsub.f32 %v60, %v310
    %v315 = vsub.f32 %v61, %v311
    %v316 = vmul.f32 %v304, %v276
    %v317 = vmul.f32 %v305, %v277
    %v318 = vmul.f32 %v306, %v278
    %v319 = vmul.f32 %v307, %v279
    %v320 = vsub.f32 %v63, %v316
    %v321 = vsub.f32 %v64, %v317
    %v322 = vsub.f32 %v65, %v318
    %v323 = vsub.f32 %v66, %v319
    %v324 = vmul.f32 %v304, %v280
    %v325 = vmul.f32 %v305, %v281
    %v326 = vmul.f32 %v306, %v282
    %v327 = vmul.f32 %v307, %v283
    %v328 = vsub.f32 %v68, %v324
    %v329 = vsub.f32 %v69, %v325
    %v330 = vsub.f32 %v70, %v326
    %v331 = vsub.f32 %v71, %v327
    %v332 = vmul.f32 %v256, %v256
    %v333 = vmul.f32 %v257, %v257
    %v334 = vmul.f32 %v258, %v258
    %v335 = vmul.f32 %v259, %v259
    %v336 = vmul.f32 %v264, %v264
    %v337 = vmul.f32 %v265, %v265
    %v338 = vmul.f32 %v266, %v266
    %v339 = vmul.f32 %v267, %v267
    %v340 = vadd.f32 %v332, %v336
    %v341 = vadd.f32 %v333, %v337
    %v342 = vadd.f32 %v334, %v338
    %v343 = vadd.f32 %v335, %v339
    %vm344 = vcmp.gt.f32.partialorder %v240, 1e-06
    %vm345 = vcmp.gt.f32.partialorder %v241, 1e-06
    %vm346 = vcmp.gt.f32.partialorder %v242, 1e-06
    %vm347 = vcmp.gt.f32.partialorder %v243, 1e-06
    %vm348 = vmand %vm160, %vm344
    %vm349 = vmand %vm161, %vm345
    %vm350 = vmand %vm162, %vm346
    %vm351 = vmand %vm163, %vm347
    %vm352 = vcmp.le.f32.partialorder %v340, 0.25
    %vm353 = vcmp.le.f32.partialorder %v341, 0.25
    %vm354 = vcmp.le.f32.partialorder %v342, 0.25
    %vm355 = vcmp.le.f32.partialorder %v343, 0.25
    %vm356 = vmand %vm348, %vm352
    %vm357 = vmand %vm349, %vm353
    %vm358 = vmand %vm350, %vm354
    %vm359 = vmand %vm351, %vm355
    %v360 = vsel %vm356, %v248, %v44
    %v361 = vsel %vm357, %v249, %v45
    %v362 = vsel %vm358, %v250, %v46
    %v363 = vsel %vm359, %v251, %v47
    %364 = vst [vmem:[#allocation7] sm:$0xff] %v360
    %365 = vst [vmem:[#allocation7 + $0x8] sm:$0xff] %v361
    %366 = vst [vmem:[#allocation7 + $0x10] sm:$0xff] %v362
    %367 = vst [vmem:[#allocation7 + $0x18] sm:$0xff] %v363
    %v368 = vsel %vm356, %v256, %v49
    %v369 = vsel %vm357, %v257, %v50
    %v370 = vsel %vm358, %v258, %v51
    %v371 = vsel %vm359, %v259, %v52
    %s372 = scalar_lea.vmem [#allocation7], 32
    %373 = vst [vmem:[%s372] sm:$0xff] %v368
    %374 = vst [vmem:[%s372 + $0x8] sm:$0xff] %v369
    %375 = vst [vmem:[%s372 + $0x10] sm:$0xff] %v370
    %376 = vst [vmem:[%s372 + $0x18] sm:$0xff] %v371
    %v377 = vsel %vm356, %v264, %v54
    %v378 = vsel %vm357, %v265, %v55
    %v379 = vsel %vm358, %v266, %v56
    %v380 = vsel %vm359, %v267, %v57
    %s381 = scalar_lea.vmem [#allocation7], 64
    %382 = vst [vmem:[%s381] sm:$0xff] %v377
    %383 = vst [vmem:[%s381 + $0x8] sm:$0xff] %v378
    %384 = vst [vmem:[%s381 + $0x10] sm:$0xff] %v379
    %385 = vst [vmem:[%s381 + $0x18] sm:$0xff] %v380
    %v386 = vsel %vm356, %v312, %v58
    %v387 = vsel %vm357, %v313, %v59
    %v388 = vsel %vm358, %v314, %v60
    %v389 = vsel %vm359, %v315, %v61
    %390 = vst [vmem:[#allocation8] sm:$0xff] %v386
    %391 = vst [vmem:[#allocation8 + $0x8] sm:$0xff] %v387
    %392 = vst [vmem:[#allocation8 + $0x10] sm:$0xff] %v388
    %393 = vst [vmem:[#allocation8 + $0x18] sm:$0xff] %v389
    %v394 = vsel %vm356, %v320, %v63
    %v395 = vsel %vm357, %v321, %v64
    %v396 = vsel %vm358, %v322, %v65
    %v397 = vsel %vm359, %v323, %v66
    %s398 = scalar_lea.vmem [#allocation8], 32
    %399 = vst [vmem:[%s398] sm:$0xff] %v394
    %400 = vst [vmem:[%s398 + $0x8] sm:$0xff] %v395
    %401 = vst [vmem:[%s398 + $0x10] sm:$0xff] %v396
    %402 = vst [vmem:[%s398 + $0x18] sm:$0xff] %v397
    %v403 = vsel %vm356, %v328, %v68
    %v404 = vsel %vm357, %v329, %v69
    %v405 = vsel %vm358, %v330, %v70
    %v406 = vsel %vm359, %v331, %v71
    %s407 = scalar_lea.vmem [#allocation8], 64
    %408 = vst [vmem:[%s407] sm:$0xff] %v403
    %409 = vst [vmem:[%s407 + $0x8] sm:$0xff] %v404
    %410 = vst [vmem:[%s407 + $0x10] sm:$0xff] %v405
    %411 = vst [vmem:[%s407 + $0x18] sm:$0xff] %v406
    %v412 = vsel %vm356, 1, 0
    %v413 = vsel %vm357, 1, 0
    %v414 = vsel %vm358, 1, 0
    %v415 = vsel %vm359, 1, 0
    %v416 = vcvt.s32.f32 %v412
    %v417 = vcvt.s32.f32 %v413
    %v418 = vcvt.s32.f32 %v414
    %v419 = vcvt.s32.f32 %v415
    %420 = vst [vmem:[#allocation10] sm:$0xff] %v416
    %421 = vst [vmem:[#allocation10 + $0x8] sm:$0xff] %v417
    %422 = vst [vmem:[#allocation10 + $0x10] sm:$0xff] %v418
    %423 = vst [vmem:[#allocation10 + $0x18] sm:$0xff] %v419
    // Predicated region
    $region18: #{tpu_custom_call.1} parent=1 // pred_check
      _
    $region19: #{tpu_custom_call.1} parent=1 // pred_check_branch
      %425 = sbr.rel (0) target = $region21
    $region20: #{tpu_custom_call.1} parent=1 // pred_region
      %s427 = ssub.s32 1536, 1536
      %428 = vsyncadd [#allocation4], %s427
      %s429 = sshll.u32 [#allocation7], 4
      %s430 = int_to_ptr.vmem [resolvable:$true] %s429
      %435 = dma.vmem_to_hbm [thread:$0]  %s430, 1536, %s2, [#allocation4], 512, 512, 32
    $region21: #{tpu_custom_call.1} parent=1 // pred_fallthru
      _
    // Predicated region
    $region22: #{tpu_custom_call.1} parent=1 // pred_check
      _
    $region23: #{tpu_custom_call.1} parent=1 // pred_check_branch
      %437 = sbr.rel (0) target = $region25
    $region24: #{tpu_custom_call.1} parent=1 // pred_region
      %s439 = ssub.s32 1536, 1536
      %440 = vsyncadd [#allocation9], %s439
      %s441 = sshll.u32 [#allocation8], 4
      %s442 = int_to_ptr.vmem [resolvable:$true] %s441
      %447 = dma.vmem_to_hbm [thread:$0]  %s442, 1536, %s3, [#allocation9], 512, 512, 32
    $region25: #{tpu_custom_call.1} parent=1 // pred_fallthru
      _
    // Predicated region
    $region26: #{tpu_custom_call.1} parent=1 // pred_check
      _
    $region27: #{tpu_custom_call.1} parent=1 // pred_check_branch
      %449 = sbr.rel (0) target = $region29
    $region28: #{tpu_custom_call.1} parent=1 // pred_region
      %s451 = ssub.s32 512, 512
      %452 = vsyncadd [#allocation9], %s451
      %s454 = sshll.u32 [#allocation10], 4
      %s455 = int_to_ptr.vmem [resolvable:$true] %s454
      %457 = dma.vmem_to_hbm [thread:$0]  %s455, 512, %s4, [#allocation9]
    $region29: #{tpu_custom_call.1} parent=1 // pred_fallthru
      _
    // Predicated region
    $region30: #{tpu_custom_call.1} parent=1 // pred_check
      _
    $region31: #{tpu_custom_call.1} parent=1 // pred_check_branch
      %459 = sbr.rel (0) target = $region33
    $region32: #{tpu_custom_call.1} parent=1 // pred_region
      %460 = dma.done [#allocation4], 1536
    $region33: #{tpu_custom_call.1} parent=1 // pred_fallthru
      _
    // Predicated region
    $region34: #{tpu_custom_call.1} parent=1 // pred_check
      _
    $region35: #{tpu_custom_call.1} parent=1 // pred_check_branch
      %462 = sbr.rel (0) target = $region37
    $region36: #{tpu_custom_call.1} parent=1 // pred_region
      %463 = dma.done [#allocation9], 1536
    $region37: #{tpu_custom_call.1} parent=1 // pred_fallthru
      _
    // Predicated region
    $region38: #{tpu_custom_call.1} parent=1 // pred_check
      _
    $region39: #{tpu_custom_call.1} parent=1 // pred_check_branch
      %465 = sbr.rel (0) target = $region41
    $region40: #{tpu_custom_call.1} parent=1 // pred_region
      %466 = dma.done [#allocation9], 512
    $region41: #{tpu_custom_call.1} parent=1 // pred_fallthru
      _
    %467 = vsyncpa [#allocation3], 1
    %468 = vsyncpa [#allocation6], 1
    %469 = vsyncpa [#allocation4], 1
    %470 = vsyncpa [#allocation9], 1

</llo_original>
